<compile_context>
chip_gen: v7x
topology: tpu7x:2x2x1
jax: 0.10.0
libtpu: 0.0.40
codegen_flags: <defaults>
</compile_context>

<pallas_src>
import numpy as np
import jax
import jax.numpy as jnp
from jax.experimental import pallas as pl
from jax.experimental.pallas import tpu as pltpu

_N_COMP = 7        # var_A .. var_G
_MAX_TB = 8        # bound the static unroll width (vreg live ranges); grow TH instead
_LANES = 128


def _vmem_limit_bytes():
    """Scoped-VMEM limit derived from the chip (96 MiB on v5e/v6e, 48 MiB on v7x)."""
    try:
        cap = int(pltpu.get_tpu_info().vmem_capacity_bytes)
    except Exception:
        cap = 64 * 1024 * 1024        # conservative default (v7x per-TC VMEM)
    return min(cap * 3 // 4, 96 * 1024 * 1024)


def _budget_elems(vmem_limit, itemsize):
    """Per-tensor elements per grid step (9 streamed inputs, double-buffered)."""
    b = (vmem_limit * 3 // 4) // (9 * 2 * itemsize)
    cap = (4 * 1024 * 1024) // itemsize            # <= 4 MiB per tensor per buffer
    return max(64 * 1024, min(cap, b))


def _choose_tiles(B, H, budget_elems, sub_mult):
    """Pick (TB, TH); W is always 128."""
    # >= 2 batch blocks whenever B >= 2 (v7x dual-TensorCore occupancy).
    tb = min(_MAX_TB, max(1, (B + 1) // 2))
    while tb > 1 and tb * min(H, sub_mult) * _LANES > budget_elems:
        tb -= 1
    th_max = max(1, budget_elems // (tb * _LANES))
    if th_max >= H:
        th = H                                     # no inner reduction axis needed
    else:
        th = min(H, max(sub_mult, (th_max // sub_mult) * sub_mult))
    return tb, th


def _make_kernel(tb):
    """Kernel processing `tb` items per step; grid = (batch_blocks, h_blocks)."""

    def kernel(mol_ref,                                        # (B_pad*7,) f32 SMEM
               var_ref, a_ref, b_ref, c_ref, d_ref, e_ref, f_ref, g_ref,
               ab_ref,                                         # (tb, TH, 128) VMEM
               out_ref,                                        # (1, tb, 1) VMEM
               acc_ref):                                       # (tb, 128) f32 scratch
        bi = pl.program_id(0)
        hi = pl.program_id(1)
        nh = pl.num_programs(1)

        @pl.when(hi == 0)
        def _init():
            acc_ref[...] = jnp.zeros_like(acc_ref)

        comps = (a_ref, b_ref, c_ref, d_ref, e_ref, f_ref, g_ref)
        base = bi * (tb * _N_COMP)
        partials = []
        for t in range(tb):                                    # small static unroll (<= 8)
            pred = var_ref[t].astype(jnp.float32)              # (TH, 128)
            for k in range(_N_COMP):
                pred = pred - comps[k][t].astype(jnp.float32) * mol_ref[base + t * _N_COMP + k]
            diff = pred - ab_ref[t].astype(jnp.float32)
            # per-lane partial sums; cross-lane reduce only once at the very end
            partials.append(jnp.sum(diff * diff, axis=0, keepdims=True))   # (1, 128)
        part = partials[0] if tb == 1 else jnp.concatenate(partials, axis=0)
        acc_ref[...] = acc_ref[...] + part                     # single full-tile update

        @pl.when(hi == nh - 1)
        def _finish():
            out_ref[0] = jnp.sum(acc_ref[...], axis=1, keepdims=True)      # (tb, 1)

    return kernel


def loss_pallas(var, var_A, var_B, var_C, var_D, var_E, var_F, var_G, mol, ab):
    tensors = [jnp.asarray(t) for t in
               (var, var_A, var_B, var_C, var_D, var_E, var_F, var_G, ab)]
    # Keep bf16 inputs in bf16 (halves HBM traffic); otherwise compute on f32 inputs.
    cdt = jnp.bfloat16 if all(t.dtype == jnp.bfloat16 for t in tensors) else jnp.float32
    tensors = [t.astype(cdt) for t in tensors]
    mol = jnp.asarray(mol, jnp.float32)

    B = tensors[0].shape[0]

    # Flatten each per-item tensor and zero-pad to a lane-dense (*, 128) layout.
    flat = [t.reshape(B, -1) for t in tensors]
    L = flat[0].shape[1]
    L_pad = max(_LANES, ((L + _LANES - 1) // _LANES) * _LANES)
    if L_pad != L:
        flat = [jnp.pad(t, ((0, 0), (0, L_pad - L))) for t in flat]   # zero pad -> SSE += 0
    H = L_pad // _LANES
    tensors3 = [t.reshape(B, H, _LANES) for t in flat]

    itemsize = jnp.dtype(cdt).itemsize
    sub_mult = 8 if itemsize == 4 else 16
    vmem_limit = _vmem_limit_bytes()
    budget = _budget_elems(vmem_limit, itemsize)
    TB, TH = _choose_tiles(B, H, budget, sub_mult)

    B_pad = ((B + TB - 1) // TB) * TB
    H_pad = ((H + TH - 1) // TH) * TH
    if B_pad != B or H_pad != H:
        pad = ((0, B_pad - B), (0, H_pad - H), (0, 0))
        tensors3 = [jnp.pad(t, pad) for t in tensors3]
    if B_pad != B:
        mol = jnp.pad(mol, ((0, B_pad - B), (0, 0)))
    # TODO(synk): for very large B, pass mol as a (TB, 7)-blocked VMEM input instead of
    # SMEM scalar prefetch (1-D SMEM pads to next_pow2(4*B_pad*7) bytes).
    mol_flat = mol.reshape(-1)                     # 1-D -> compact SMEM padding

    nb = B_pad // TB
    nh = H_pad // TH

    item_spec = pl.BlockSpec((TB, TH, _LANES), lambda b, h, mol_ref: (b, h, 0))
    out_spec = pl.BlockSpec((1, TB, 1), lambda b, h, mol_ref: (b, 0, 0))

    cost = pl.CostEstimate(
        flops=int(17 * B_pad * H_pad * _LANES),
        transcendentals=0,
        bytes_accessed=int(9 * B_pad * H_pad * _LANES * itemsize + B_pad * (_N_COMP + 1) * 4),
    )

    out = pl.pallas_call(
        _make_kernel(TB),
        out_shape=jax.ShapeDtypeStruct((nb, TB, 1), jnp.float32),
        grid_spec=pltpu.PrefetchScalarGridSpec(
            num_scalar_prefetch=1,                 # mol -> SMEM scalars
            grid=(nb, nh),                         # reduction axis last
            in_specs=[item_spec] * 9,              # var, A..G, ab
            out_specs=out_spec,
            scratch_shapes=[pltpu.VMEM((TB, _LANES), jnp.float32)],
        ),
        compiler_params=pltpu.CompilerParams(
            dimension_semantics=("parallel", "arbitrary"),
            vmem_limit_bytes=vmem_limit,
        ),
        cost_estimate=cost,
    )(mol_flat, *tensors3)
    return out.reshape(-1)[:B]                     # (B,), batch order preserved


def loss_reference(var, var_A, var_B, var_C, var_D, var_E, var_F, var_G, mol, ab):
    comps = jnp.stack([var_A, var_B, var_C, var_D, var_E, var_F, var_G], axis=1)
    pred = var - jnp.sum(comps * mol[:, :, None, None], axis=1)
    diff = pred - ab
    return jnp.sum(diff * diff, axis=(1, 2))


if __name__ == "__main__":
    B, H, W = 2, 8, 128
    key = jax.random.PRNGKey(0)
    keys = jax.random.split(key, 10)
    var   = jax.random.normal(keys[0], (B, H, W), jnp.float32)
    var_A = jax.random.normal(keys[1], (B, H, W), jnp.float32)
    var_B = jax.random.normal(keys[2], (B, H, W), jnp.float32)
    var_C = jax.random.normal(keys[3], (B, H, W), jnp.float32)
    var_D = jax.random.normal(keys[4], (B, H, W), jnp.float32)
    var_E = jax.random.normal(keys[5], (B, H, W), jnp.float32)
    var_F = jax.random.normal(keys[6], (B, H, W), jnp.float32)
    var_G = jax.random.normal(keys[7], (B, H, W), jnp.float32)
    mol   = jax.random.normal(keys[8], (B, 7),    jnp.float32)
    ab    = jax.random.normal(keys[9], (B, H, W), jnp.float32)

    out = loss_pallas(var, var_A, var_B, var_C, var_D, var_E, var_F, var_G, mol, ab)
    out = jax.block_until_ready(out)

    ref = loss_reference(var, var_A, var_B, var_C, var_D, var_E, var_F, var_G, mol, ab)
    np.testing.assert_allclose(np.asarray(out), np.asarray(ref), rtol=1e-4, atol=1e-3)

    print("KERNEL_OK")
</pallas_src>

<mosaic_0001>
module attributes {stable_mosaic.version = 11 : i64} {
  func.func @kernel(%arg0: i32, %arg1: i32, %arg2: memref<14xf32, #tpu.memory_space<smem>>, %arg3: memref<1x8x128xf32, #tpu.memory_space<vmem>>, %arg4: memref<1x8x128xf32, #tpu.memory_space<vmem>>, %arg5: memref<1x8x128xf32, #tpu.memory_space<vmem>>, %arg6: memref<1x8x128xf32, #tpu.memory_space<vmem>>, %arg7: memref<1x8x128xf32, #tpu.memory_space<vmem>>, %arg8: memref<1x8x128xf32, #tpu.memory_space<vmem>>, %arg9: memref<1x8x128xf32, #tpu.memory_space<vmem>>, %arg10: memref<1x8x128xf32, #tpu.memory_space<vmem>>, %arg11: memref<1x8x128xf32, #tpu.memory_space<vmem>>, %arg12: memref<1x1x1xf32, #tpu.memory_space<vmem>>, %arg13: memref<1x128xf32, #tpu.memory_space<vmem>>) attributes {dimension_semantics = [#tpu.dimension_semantics<parallel>, #tpu.dimension_semantics<arbitrary>], iteration_bounds = array<i64: 2, 1>, scalar_prefetch = 1 : i64, scratch_operands = 1 : i64, tpu.core_type = #tpu.core_type<tc>, window_params = [{transform_indices = @transform_0, window_bounds = array<i64: 1, 8, 128>}, {transform_indices = @transform_1, window_bounds = array<i64: 1, 8, 128>}, {transform_indices = @transform_2, window_bounds = array<i64: 1, 8, 128>}, {transform_indices = @transform_3, window_bounds = array<i64: 1, 8, 128>}, {transform_indices = @transform_4, window_bounds = array<i64: 1, 8, 128>}, {transform_indices = @transform_5, window_bounds = array<i64: 1, 8, 128>}, {transform_indices = @transform_6, window_bounds = array<i64: 1, 8, 128>}, {transform_indices = @transform_7, window_bounds = array<i64: 1, 8, 128>}, {transform_indices = @transform_8, window_bounds = array<i64: 1, 8, 128>}, {transform_indices = @transform_9, window_bounds = array<i64: 1, 1, 1>}]} {
    %c0_i32 = arith.constant 0 : i32
    %0 = arith.cmpi eq, %arg1, %c0_i32 : i32
    %1 = arith.extui %0 : i1 to i32
    %c0_i32_0 = arith.constant 0 : i32
    %2 = arith.cmpi ne, %1, %c0_i32_0 : i32
    scf.if %2 {
      %cst_41 = arith.constant 0.000000e+00 : f32
      %81 = vector.broadcast %cst_41 : f32 to vector<1x128xf32>
      %c0_42 = arith.constant 0 : index
      %c0_43 = arith.constant 0 : index
      %82 = vector.load %arg13[%c0_42, %c0_43] : memref<1x128xf32, #tpu.memory_space<vmem>>, vector<1x128xf32>
      tpu.vector_store %arg13[%c0_42, %c0_43], %81 {strides = array<i32>} : memref<1x128xf32, #tpu.memory_space<vmem>>, vector<1x128xf32>,
    } else {
    }
    %c7_i32 = arith.constant 7 : i32
    %3 = arith.muli %arg0, %c7_i32 : i32
    %c0 = arith.constant 0 : index
    %c0_1 = arith.constant 0 : index
    %c0_2 = arith.constant 0 : index
    %4 = vector.load %arg3[%c0, %c0_1, %c0_2] : memref<1x8x128xf32, #tpu.memory_space<vmem>>, vector<1x8x128xf32>
    %5 = vector.shape_cast %4 : vector<1x8x128xf32> to vector<8x128xf32>
    %c0_3 = arith.constant 0 : index
    %c0_4 = arith.constant 0 : index
    %c0_5 = arith.constant 0 : index
    %6 = vector.load %arg4[%c0_3, %c0_4, %c0_5] : memref<1x8x128xf32, #tpu.memory_space<vmem>>, vector<1x8x128xf32>
    %7 = vector.shape_cast %6 : vector<1x8x128xf32> to vector<8x128xf32>
    %c0_i32_6 = arith.constant 0 : i32
    %8 = arith.addi %3, %c0_i32_6 : i32
    %c0_i32_7 = arith.constant 0 : i32
    %9 = arith.addi %8, %c0_i32_7 : i32
    %10 = arith.index_cast %9 : i32 to index
    %11 = memref.load %arg2[%10] : memref<14xf32, #tpu.memory_space<smem>>
    %12 = vector.broadcast %11 : f32 to vector<8x128xf32>
    %13 = arith.mulf %7, %12 : vector<8x128xf32>
    %14 = arith.subf %5, %13 : vector<8x128xf32>
    %c0_8 = arith.constant 0 : index
    %c0_9 = arith.constant 0 : index
    %c0_10 = arith.constant 0 : index
    %15 = vector.load %arg5[%c0_8, %c0_9, %c0_10] : memref<1x8x128xf32, #tpu.memory_space<vmem>>, vector<1x8x128xf32>
    %16 = vector.shape_cast %15 : vector<1x8x128xf32> to vector<8x128xf32>
    %c0_i32_11 = arith.constant 0 : i32
    %17 = arith.addi %3, %c0_i32_11 : i32
    %c1_i32 = arith.constant 1 : i32
    %18 = arith.addi %17, %c1_i32 : i32
    %19 = arith.index_cast %18 : i32 to index
    %20 = memref.load %arg2[%19] : memref<14xf32, #tpu.memory_space<smem>>
    %21 = vector.broadcast %20 : f32 to vector<8x128xf32>
    %22 = arith.mulf %16, %21 : vector<8x128xf32>
    %23 = arith.subf %14, %22 : vector<8x128xf32>
    %c0_12 = arith.constant 0 : index
    %c0_13 = arith.constant 0 : index
    %c0_14 = arith.constant 0 : index
    %24 = vector.load %arg6[%c0_12, %c0_13, %c0_14] : memref<1x8x128xf32, #tpu.memory_space<vmem>>, vector<1x8x128xf32>
    %25 = vector.shape_cast %24 : vector<1x8x128xf32> to vector<8x128xf32>
    %c0_i32_15 = arith.constant 0 : i32
    %26 = arith.addi %3, %c0_i32_15 : i32
    %c2_i32 = arith.constant 2 : i32
    %27 = arith.addi %26, %c2_i32 : i32
    %28 = arith.index_cast %27 : i32 to index
    %29 = memref.load %arg2[%28] : memref<14xf32, #tpu.memory_space<smem>>
    %30 = vector.broadcast %29 : f32 to vector<8x128xf32>
    %31 = arith.mulf %25, %30 : vector<8x128xf32>
    %32 = arith.subf %23, %31 : vector<8x128xf32>
    %c0_16 = arith.constant 0 : index
    %c0_17 = arith.constant 0 : index
    %c0_18 = arith.constant 0 : index
    %33 = vector.load %arg7[%c0_16, %c0_17, %c0_18] : memref<1x8x128xf32, #tpu.memory_space<vmem>>, vector<1x8x128xf32>
    %34 = vector.shape_cast %33 : vector<1x8x128xf32> to vector<8x128xf32>
    %c0_i32_19 = arith.constant 0 : i32
    %35 = arith.addi %3, %c0_i32_19 : i32
    %c3_i32 = arith.constant 3 : i32
    %36 = arith.addi %35, %c3_i32 : i32
    %37 = arith.index_cast %36 : i32 to index
    %38 = memref.load %arg2[%37] : memref<14xf32, #tpu.memory_space<smem>>
    %39 = vector.broadcast %38 : f32 to vector<8x128xf32>
    %40 = arith.mulf %34, %39 : vector<8x128xf32>
    %41 = arith.subf %32, %40 : vector<8x128xf32>
    %c0_20 = arith.constant 0 : index
    %c0_21 = arith.constant 0 : index
    %c0_22 = arith.constant 0 : index
    %42 = vector.load %arg8[%c0_20, %c0_21, %c0_22] : memref<1x8x128xf32, #tpu.memory_space<vmem>>, vector<1x8x128xf32>
    %43 = vector.shape_cast %42 : vector<1x8x128xf32> to vector<8x128xf32>
    %c0_i32_23 = arith.constant 0 : i32
    %44 = arith.addi %3, %c0_i32_23 : i32
    %c4_i32 = arith.constant 4 : i32
    %45 = arith.addi %44, %c4_i32 : i32
    %46 = arith.index_cast %45 : i32 to index
    %47 = memref.load %arg2[%46] : memref<14xf32, #tpu.memory_space<smem>>
    %48 = vector.broadcast %47 : f32 to vector<8x128xf32>
    %49 = arith.mulf %43, %48 : vector<8x128xf32>
    %50 = arith.subf %41, %49 : vector<8x128xf32>
    %c0_24 = arith.constant 0 : index
    %c0_25 = arith.constant 0 : index
    %c0_26 = arith.constant 0 : index
    %51 = vector.load %arg9[%c0_24, %c0_25, %c0_26] : memref<1x8x128xf32, #tpu.memory_space<vmem>>, vector<1x8x128xf32>
    %52 = vector.shape_cast %51 : vector<1x8x128xf32> to vector<8x128xf32>
    %c0_i32_27 = arith.constant 0 : i32
    %53 = arith.addi %3, %c0_i32_27 : i32
    %c5_i32 = arith.constant 5 : i32
    %54 = arith.addi %53, %c5_i32 : i32
    %55 = arith.index_cast %54 : i32 to index
    %56 = memref.load %arg2[%55] : memref<14xf32, #tpu.memory_space<smem>>
    %57 = vector.broadcast %56 : f32 to vector<8x128xf32>
    %58 = arith.mulf %52, %57 : vector<8x128xf32>
    %59 = arith.subf %50, %58 : vector<8x128xf32>
    %c0_28 = arith.constant 0 : index
    %c0_29 = arith.constant 0 : index
    %c0_30 = arith.constant 0 : index
    %60 = vector.load %arg10[%c0_28, %c0_29, %c0_30] : memref<1x8x128xf32, #tpu.memory_space<vmem>>, vector<1x8x128xf32>
    %61 = vector.shape_cast %60 : vector<1x8x128xf32> to vector<8x128xf32>
    %c0_i32_31 = arith.constant 0 : i32
    %62 = arith.addi %3, %c0_i32_31 : i32
    %c6_i32 = arith.constant 6 : i32
    %63 = arith.addi %62, %c6_i32 : i32
    %64 = arith.index_cast %63 : i32 to index
    %65 = memref.load %arg2[%64] : memref<14xf32, #tpu.memory_space<smem>>
    %66 = vector.broadcast %65 : f32 to vector<8x128xf32>
    %67 = arith.mulf %61, %66 : vector<8x128xf32>
    %68 = arith.subf %59, %67 : vector<8x128xf32>
    %c0_32 = arith.constant 0 : index
    %c0_33 = arith.constant 0 : index
    %c0_34 = arith.constant 0 : index
    %69 = vector.load %arg11[%c0_32, %c0_33, %c0_34] : memref<1x8x128xf32, #tpu.memory_space<vmem>>, vector<1x8x128xf32>
    %70 = vector.shape_cast %69 : vector<1x8x128xf32> to vector<8x128xf32>
    %71 = arith.subf %68, %70 : vector<8x128xf32>
    %72 = arith.mulf %71, %71 : vector<8x128xf32>
    %cst = arith.constant dense<0.000000e+00> : vector<128xf32>
    %73 = vector.multi_reduction <add>, %72, %cst [0] : vector<8x128xf32> to vector<128xf32>
    %74 = vector.shape_cast %73 : vector<128xf32> to vector<1x128xf32>
    %c0_35 = arith.constant 0 : index
    %c0_36 = arith.constant 0 : index
    %75 = vector.load %arg13[%c0_35, %c0_36] : memref<1x128xf32, #tpu.memory_space<vmem>>, vector<1x128xf32>
    %76 = arith.addf %75, %74 : vector<1x128xf32>
    %c0_37 = arith.constant 0 : index
    %c0_38 = arith.constant 0 : index
    %77 = vector.load %arg13[%c0_37, %c0_38] : memref<1x128xf32, #tpu.memory_space<vmem>>, vector<1x128xf32>
    tpu.vector_store %arg13[%c0_37, %c0_38], %76 {strides = array<i32>} : memref<1x128xf32, #tpu.memory_space<vmem>>, vector<1x128xf32>,
    %c0_i32_39 = arith.constant 0 : i32
    %78 = arith.cmpi eq, %arg1, %c0_i32_39 : i32
    %79 = arith.extui %78 : i1 to i32
    %c0_i32_40 = arith.constant 0 : i32
    %80 = arith.cmpi ne, %79, %c0_i32_40 : i32
    scf.if %80 {
      %c0_41 = arith.constant 0 : index
      %c0_42 = arith.constant 0 : index
      %81 = vector.load %arg13[%c0_41, %c0_42] : memref<1x128xf32, #tpu.memory_space<vmem>>, vector<1x128xf32>
      %cst_43 = arith.constant dense<0.000000e+00> : vector<1xf32>
      %82 = vector.multi_reduction <add>, %81, %cst_43 [1] : vector<1x128xf32> to vector<1xf32>
      %83 = vector.shape_cast %82 : vector<1xf32> to vector<1x1xf32>
      %c0_44 = arith.constant 0 : index
      %c0_45 = arith.constant 0 : index
      %c0_46 = arith.constant 0 : index
      %84 = vector.load %arg12[%c0_44, %c0_45, %c0_46] : memref<1x1x1xf32, #tpu.memory_space<vmem>>, vector<1x1x1xf32>
      %85 = vector.shape_cast %84 : vector<1x1x1xf32> to vector<1x1xf32>
      %86 = vector.shape_cast %83 : vector<1x1xf32> to vector<1x1x1xf32>
      tpu.vector_store %arg12[%c0_44, %c0_45, %c0_46], %86 {strides = array<i32>} : memref<1x1x1xf32, #tpu.memory_space<vmem>>, vector<1x1x1xf32>,
    } else {
    }
    return
  }
  func.func @transform_0(%arg0: i32, %arg1: i32, %arg2: memref<14xf32, #tpu.memory_space<smem>>) -> (i32, i32, i32) {
    %c0_i32 = arith.constant 0 : i32
    %c0_i32_0 = arith.constant 0 : i32
    return %arg0, %arg1, %c0_i32 : i32, i32, i32
  }
  func.func @transform_1(%arg0: i32, %arg1: i32, %arg2: memref<14xf32, #tpu.memory_space<smem>>) -> (i32, i32, i32) {
    %c0_i32 = arith.constant 0 : i32
    %c0_i32_0 = arith.constant 0 : i32
    return %arg0, %arg1, %c0_i32 : i32, i32, i32
  }
  func.func @transform_2(%arg0: i32, %arg1: i32, %arg2: memref<14xf32, #tpu.memory_space<smem>>) -> (i32, i32, i32) {
    %c0_i32 = arith.constant 0 : i32
    %c0_i32_0 = arith.constant 0 : i32
    return %arg0, %arg1, %c0_i32 : i32, i32, i32
  }
  func.func @transform_3(%arg0: i32, %arg1: i32, %arg2: memref<14xf32, #tpu.memory_space<smem>>) -> (i32, i32, i32) {
    %c0_i32 = arith.constant 0 : i32
    %c0_i32_0 = arith.constant 0 : i32
    return %arg0, %arg1, %c0_i32 : i32, i32, i32
  }
  func.func @transform_4(%arg0: i32, %arg1: i32, %arg2: memref<14xf32, #tpu.memory_space<smem>>) -> (i32, i32, i32) {
    %c0_i32 = arith.constant 0 : i32
    %c0_i32_0 = arith.constant 0 : i32
    return %arg0, %arg1, %c0_i32 : i32, i32, i32
  }
  func.func @transform_5(%arg0: i32, %arg1: i32, %arg2: memref<14xf32, #tpu.memory_space<smem>>) -> (i32, i32, i32) {
    %c0_i32 = arith.constant 0 : i32
    %c0_i32_0 = arith.constant 0 : i32
    return %arg0, %arg1, %c0_i32 : i32, i32, i32
  }
  func.func @transform_6(%arg0: i32, %arg1: i32, %arg2: memref<14xf32, #tpu.memory_space<smem>>) -> (i32, i32, i32) {
    %c0_i32 = arith.constant 0 : i32
    %c0_i32_0 = arith.constant 0 : i32
    return %arg0, %arg1, %c0_i32 : i32, i32, i32
  }
  func.func @transform_7(%arg0: i32, %arg1: i32, %arg2: memref<14xf32, #tpu.memory_space<smem>>) -> (i32, i32, i32) {
    %c0_i32 = arith.constant 0 : i32
    %c0_i32_0 = arith.constant 0 : i32
    return %arg0, %arg1, %c0_i32 : i32, i32, i32
  }
  func.func @transform_8(%arg0: i32, %arg1: i32, %arg2: memref<14xf32, #tpu.memory_space<smem>>) -> (i32, i32, i32) {
    %c0_i32 = arith.constant 0 : i32
    %c0_i32_0 = arith.constant 0 : i32
    return %arg0, %arg1, %c0_i32 : i32, i32, i32
  }
  func.func @transform_9(%arg0: i32, %arg1: i32, %arg2: memref<14xf32, #tpu.memory_space<smem>>) -> (i32, i32, i32) {
    %c0_i32 = arith.constant 0 : i32
    %c0_i32_0 = arith.constant 0 : i32
    %c0_i32_1 = arith.constant 0 : i32
    return %arg0, %c0_i32, %c0_i32_0 : i32, i32, i32
  }
}

</mosaic_0001>

<llo_original>
// kernel: tpu_custom_call.1
$region0: #{tpu_custom_call.1}
  #allocation0 [shape = 'u32[]', space=smem, size = 0x4, offset = 0x4, fixed_abs, tag = 'smem constant byte address 0x4 - core index']
  #allocation1 [shape = 'u32[144,128]{1,0:T(1,128)}', space=vmem, size = 0x12000, scoped, tag = 'internal scratch']
  #allocation2 [shape = 'f32[1,128]{1,0:T(1,128)}', space=vmem, size = 0x200, scoped, tag = 'scratch operand']
  #allocation3 [shape = 's32[1]{0}', space=sflag, size = 0x4, scoped, tag = 'scoped memory for tpu_custom_call.1']
  #allocation4 [shape = 'u8[512]{0}', space=smem, size = 0x200, scoped, tag = 'prefetched SMEM operand 0']
  %s0 = inlined_call_operand.hbm [shape: f32[14], index: 0, kind: input, shape index: {}]
  %s1 = inlined_call_operand.hbm [shape: f32[2,8,128], index: 1, kind: input, shape index: {}]
  %s2 = inlined_call_operand.hbm [shape: f32[2,8,128], index: 2, kind: input, shape index: {}]
  %s3 = inlined_call_operand.hbm [shape: f32[2,8,128], index: 3, kind: input, shape index: {}]
  %s4 = inlined_call_operand.hbm [shape: f32[2,8,128], index: 4, kind: input, shape index: {}]
  %s5 = inlined_call_operand.vmem [shape: f32[2,8,128], index: 5, kind: input, shape index: {}]
  %s6 = inlined_call_operand.hbm [shape: f32[2,8,128], index: 6, kind: input, shape index: {}]
  %s7 = inlined_call_operand.hbm [shape: f32[2,8,128], index: 7, kind: input, shape index: {}]
  %s8 = inlined_call_operand.hbm [shape: f32[2,8,128], index: 8, kind: input, shape index: {}]
  %s9 = inlined_call_operand.vmem [shape: f32[2,8,128], index: 9, kind: input, shape index: {}]
  %s10 = inlined_call_operand.vmem [shape: f32[2,1,1], index: 10, kind: output, shape index: {}]
  %s11 = sld [smem:[#allocation0]]
  $region105: #{tpu_custom_call.1} parent=0
    _
  %s13 = ssub.s32 1, %s11
  %s14 = scalar_select 0, %s13, %s11
  %16 = dma.hbm_to_smem %s0, 16, [#allocation4], [#allocation3]
  %17 = dma.done [#allocation3], 16
  %18 = sfence
  $region1: #{tpu_custom_call.1} parent=0
    #allocation5 [shape = 'u8[8192]{0}', space=vmem, size = 0x2000, scoped, tag = 'input window, operand 1']
    #allocation6 [shape = 's32[2]{0}', space=sflag, size = 0x8, scoped, tag = 'scoped memory for tpu_custom_call.1']
    #allocation7 [shape = 'u8[8192]{0}', space=vmem, size = 0x2000, scoped, tag = 'input window, operand 2']
    #allocation8 [shape = 's32[2]{0}', space=sflag, size = 0x8, scoped, tag = 'scoped memory for tpu_custom_call.1']
    #allocation9 [shape = 'u8[8192]{0}', space=vmem, size = 0x2000, scoped, tag = 'input window, operand 3']
    #allocation10 [shape = 'u8[8192]{0}', space=vmem, size = 0x2000, scoped, tag = 'input window, operand 4']
    #allocation11 [shape = 's32[2]{0}', space=sflag, size = 0x8, scoped, tag = 'scoped memory for tpu_custom_call.1']
    #allocation12 [shape = 'u8[8192]{0}', space=vmem, size = 0x2000, scoped, tag = 'input window, operand 6']
    #allocation13 [shape = 'u8[8192]{0}', space=vmem, size = 0x2000, scoped, tag = 'input window, operand 7']
    #allocation14 [shape = 's32[2]{0}', space=sflag, size = 0x8, scoped, tag = 'scoped memory for tpu_custom_call.1']
    #allocation15 [shape = 'u8[8192]{0}', space=vmem, size = 0x2000, scoped, tag = 'input window, operand 8']
    %19 = vsyncpa [#allocation6], 0
    %s20 = scalar_lea.sflag [#allocation6], 1
    %21 = vsyncpa %s20, 0
    %22 = vsyncpa [#allocation8], 0
    %s23 = scalar_lea.sflag [#allocation8], 1
    %24 = vsyncpa %s23, 0
    %25 = vsyncpa [#allocation11], 0
    %s26 = scalar_lea.sflag [#allocation11], 1
    %27 = vsyncpa %s26, 0
    %28 = vsyncpa [#allocation14], 0
    %s29 = scalar_lea.sflag [#allocation14], 1
    %30 = vsyncpa %s29, 0
    loop: start=0, step=1, limit=4
    $region2: #{tpu_custom_call.1} parent=1 // loop_pre_header
      _
    $region3: #{tpu_custom_call.1} parent=1 // loop_header
      %s32 = sphi 0, %s36
      %p33 = scmp.ge.s32.totalorder %s32, 4
      %s39 = sphi 0, %s51
      %s40 = sphi 0, %s47
      %s41 = sphi 0, %s39
      %s42 = sphi 0, %s40
      %s43 = sphi 0, %s41
      %s44 = sphi 0, %s42
      %s56 = sphi 0, %s58
      %s59 = sphi 0, %s56
      %s60 = sphi 0, %s59
      %s76 = sphi 0, %s60
      %s84 = sphi 0, %s86
      %s87 = sphi 0, %s84
      %s88 = sphi 0, %s87
      %s104 = sphi 0, %s88
      %s112 = sphi 0, %s114
      %s115 = sphi 0, %s112
      %s116 = sphi 0, %s115
      %s132 = sphi 0, %s116
      %s140 = sphi 0, %s142
      %s143 = sphi 0, %s140
      %s144 = sphi 0, %s143
      %s160 = sphi 0, %s144
      %s168 = sphi 0, %s170
      %s171 = sphi 0, %s168
      %s172 = sphi 0, %s171
      %s188 = sphi 0, %s172
      %s196 = sphi 0, %s198
      %s199 = sphi 0, %s196
      %s200 = sphi 0, %s199
      %s216 = sphi 0, %s200
      %s224 = sphi 0, %s226
      %s227 = sphi 0, %s224
      %s228 = sphi 0, %s227
      %s244 = sphi 0, %s228
      %s252 = sphi 0, %s254
      %s255 = sphi 0, %s252
      %s256 = sphi 0, %s255
      %s272 = sphi 0, %s256
      %s280 = sphi 0, %s282
      %s283 = sphi 0, %s280
      %s284 = sphi 0, %s283
      %s300 = sphi 0, %s284
      %s306 = sphi 0, %s308
      %s309 = sphi 0, %s306
      %s310 = sphi 0, %s309
      %s326 = sphi 0, %s310
    $region4: #{tpu_custom_call.1} parent=1 // loop_header_branch
      %35 = sbr.rel (%p33) target = $region8
    $region5: #{tpu_custom_call.1} parent=1 // loop_body
      %s37 = ssub.s32 %s32, 1
      %s38 = ssub.s32 %s32, 2
      %s45 = sadd.s32 1, %s40
      %p46 = scmp.ge.s32.totalorder %s45, 1
      %s47 = scalar_select %p46, 0, %s45
      %s48 = sadd.s32 1, %s39
      %s49 = scalar_select %p46, %s48, %s39
      %p50 = scmp.ge.s32.totalorder %s49, 2
      %s51 = scalar_select %p50, 0, %s49
      %s52 = ssub.s32 %s39, %s51
      %s53 = ssub.s32 %s40, %s47
      %s54 = sor.u32 %s52, %s53
      %p55 = scmp.eq.s32.totalorder %s54, 0
      %s57 = sadd.s32 %s56, 1
      %s58 = scalar_select %p55, %s56, %s57
      %p61 = pneg %p55
      %p62 = scmp.eq.s32.totalorder %s32, 1
      %p63 = por %p61, %p62
      %p64 = scmp.ne.s32.totalorder %s56, %s59
      %p65 = scmp.eq.s32.totalorder %s32, 0
      %p66 = por %p64, %p65
      %p67 = scmp.ne.s32.totalorder %s56, %s59
      %p68 = scmp.eq.s32.totalorder %s37, 1
      %p69 = por %p67, %p68
      %p70 = scmp.ne.s32.totalorder %s59, %s60
      %p71 = scmp.eq.s32.totalorder %s37, 0
      %p72 = por %p70, %p71
      %p73 = scmp.ne.s32.totalorder %s59, %s60
      %p74 = scmp.eq.s32.totalorder %s38, 1
      %p75 = por %p73, %p74
      %p77 = scmp.ne.s32.totalorder %s60, %s76
      %p78 = scmp.eq.s32.totalorder %s38, 0
      %p79 = por %p77, %p78
      %s80 = ssub.s32 %s39, %s51
      %s81 = ssub.s32 %s40, %s47
      %s82 = sor.u32 %s80, %s81
      %p83 = scmp.eq.s32.totalorder %s82, 0
      %s85 = sadd.s32 %s84, 1
      %s86 = scalar_select %p83, %s84, %s85
      %p89 = pneg %p83
      %p90 = scmp.eq.s32.totalorder %s32, 1
      %p91 = por %p89, %p90
      %p92 = scmp.ne.s32.totalorder %s84, %s87
      %p93 = scmp.eq.s32.totalorder %s32, 0
      %p94 = por %p92, %p93
      %p95 = scmp.ne.s32.totalorder %s84, %s87
      %p96 = scmp.eq.s32.totalorder %s37, 1
      %p97 = por %p95, %p96
      %p98 = scmp.ne.s32.totalorder %s87, %s88
      %p99 = scmp.eq.s32.totalorder %s37, 0
      %p100 = por %p98, %p99
      %p101 = scmp.ne.s32.totalorder %s87, %s88
      %p102 = scmp.eq.s32.totalorder %s38, 1
      %p103 = por %p101, %p102
      %p105 = scmp.ne.s32.totalorder %s88, %s104
      %p106 = scmp.eq.s32.totalorder %s38, 0
      %p107 = por %p105, %p106
      %s108 = ssub.s32 %s39, %s51
      %s109 = ssub.s32 %s40, %s47
      %s110 = sor.u32 %s108, %s109
      %p111 = scmp.eq.s32.totalorder %s110, 0
      %s113 = sadd.s32 %s112, 1
      %s114 = scalar_select %p111, %s112, %s113
      %p117 = pneg %p111
      %p118 = scmp.eq.s32.totalorder %s32, 1
      %p119 = por %p117, %p118
      %p120 = scmp.ne.s32.totalorder %s112, %s115
      %p121 = scmp.eq.s32.totalorder %s32, 0
      %p122 = por %p120, %p121
      %p123 = scmp.ne.s32.totalorder %s112, %s115
      %p124 = scmp.eq.s32.totalorder %s37, 1
      %p125 = por %p123, %p124
      %p126 = scmp.ne.s32.totalorder %s115, %s116
      %p127 = scmp.eq.s32.totalorder %s37, 0
      %p128 = por %p126, %p127
      %p129 = scmp.ne.s32.totalorder %s115, %s116
      %p130 = scmp.eq.s32.totalorder %s38, 1
      %p131 = por %p129, %p130
      %p133 = scmp.ne.s32.totalorder %s116, %s132
      %p134 = scmp.eq.s32.totalorder %s38, 0
      %p135 = por %p133, %p134
      %s136 = ssub.s32 %s39, %s51
      %s137 = ssub.s32 %s40, %s47
      %s138 = sor.u32 %s136, %s137
      %p139 = scmp.eq.s32.totalorder %s138, 0
      %s141 = sadd.s32 %s140, 1
      %s142 = scalar_select %p139, %s140, %s141
      %p145 = pneg %p139
      %p146 = scmp.eq.s32.totalorder %s32, 1
      %p147 = por %p145, %p146
      %p148 = scmp.ne.s32.totalorder %s140, %s143
      %p149 = scmp.eq.s32.totalorder %s32, 0
      %p150 = por %p148, %p149
      %p151 = scmp.ne.s32.totalorder %s140, %s143
      %p152 = scmp.eq.s32.totalorder %s37, 1
      %p153 = por %p151, %p152
      %p154 = scmp.ne.s32.totalorder %s143, %s144
      %p155 = scmp.eq.s32.totalorder %s37, 0
      %p156 = por %p154, %p155
      %p157 = scmp.ne.s32.totalorder %s143, %s144
      %p158 = scmp.eq.s32.totalorder %s38, 1
      %p159 = por %p157, %p158
      %p161 = scmp.ne.s32.totalorder %s144, %s160
      %p162 = scmp.eq.s32.totalorder %s38, 0
      %p163 = por %p161, %p162
      %s164 = ssub.s32 %s39, %s51
      %s165 = ssub.s32 %s40, %s47
      %s166 = sor.u32 %s164, %s165
      %p167 = scmp.eq.s32.totalorder %s166, 0
      %s169 = sadd.s32 %s168, 1
      %s170 = scalar_select %p167, %s168, %s169
      %p173 = pneg %p167
      %p174 = scmp.eq.s32.totalorder %s32, 1
      %p175 = por %p173, %p174
      %p176 = scmp.ne.s32.totalorder %s168, %s171
      %p177 = scmp.eq.s32.totalorder %s32, 0
      %p178 = por %p176, %p177
      %p179 = scmp.ne.s32.totalorder %s168, %s171
      %p180 = scmp.eq.s32.totalorder %s37, 1
      %p181 = por %p179, %p180
      %p182 = scmp.ne.s32.totalorder %s171, %s172
      %p183 = scmp.eq.s32.totalorder %s37, 0
      %p184 = por %p182, %p183
      %p185 = scmp.ne.s32.totalorder %s171, %s172
      %p186 = scmp.eq.s32.totalorder %s38, 1
      %p187 = por %p185, %p186
      %p189 = scmp.ne.s32.totalorder %s172, %s188
      %p190 = scmp.eq.s32.totalorder %s38, 0
      %p191 = por %p189, %p190
      %s192 = ssub.s32 %s39, %s51
      %s193 = ssub.s32 %s40, %s47
      %s194 = sor.u32 %s192, %s193
      %p195 = scmp.eq.s32.totalorder %s194, 0
      %s197 = sadd.s32 %s196, 1
      %s198 = scalar_select %p195, %s196, %s197
      %p201 = pneg %p195
      %p202 = scmp.eq.s32.totalorder %s32, 1
      %p203 = por %p201, %p202
      %p204 = scmp.ne.s32.totalorder %s196, %s199
      %p205 = scmp.eq.s32.totalorder %s32, 0
      %p206 = por %p204, %p205
      %p207 = scmp.ne.s32.totalorder %s196, %s199
      %p208 = scmp.eq.s32.totalorder %s37, 1
      %p209 = por %p207, %p208
      %p210 = scmp.ne.s32.totalorder %s199, %s200
      %p211 = scmp.eq.s32.totalorder %s37, 0
      %p212 = por %p210, %p211
      %p213 = scmp.ne.s32.totalorder %s199, %s200
      %p214 = scmp.eq.s32.totalorder %s38, 1
      %p215 = por %p213, %p214
      %p217 = scmp.ne.s32.totalorder %s200, %s216
      %p218 = scmp.eq.s32.totalorder %s38, 0
      %p219 = por %p217, %p218
      %s220 = ssub.s32 %s39, %s51
      %s221 = ssub.s32 %s40, %s47
      %s222 = sor.u32 %s220, %s221
      %p223 = scmp.eq.s32.totalorder %s222, 0
      %s225 = sadd.s32 %s224, 1
      %s226 = scalar_select %p223, %s224, %s225
      %p229 = pneg %p223
      %p230 = scmp.eq.s32.totalorder %s32, 1
      %p231 = por %p229, %p230
      %p232 = scmp.ne.s32.totalorder %s224, %s227
      %p233 = scmp.eq.s32.totalorder %s32, 0
      %p234 = por %p232, %p233
      %p235 = scmp.ne.s32.totalorder %s224, %s227
      %p236 = scmp.eq.s32.totalorder %s37, 1
      %p237 = por %p235, %p236
      %p238 = scmp.ne.s32.totalorder %s227, %s228
      %p239 = scmp.eq.s32.totalorder %s37, 0
      %p240 = por %p238, %p239
      %p241 = scmp.ne.s32.totalorder %s227, %s228
      %p242 = scmp.eq.s32.totalorder %s38, 1
      %p243 = por %p241, %p242
      %p245 = scmp.ne.s32.totalorder %s228, %s244
      %p246 = scmp.eq.s32.totalorder %s38, 0
      %p247 = por %p245, %p246
      %s248 = ssub.s32 %s39, %s51
      %s249 = ssub.s32 %s40, %s47
      %s250 = sor.u32 %s248, %s249
      %p251 = scmp.eq.s32.totalorder %s250, 0
      %s253 = sadd.s32 %s252, 1
      %s254 = scalar_select %p251, %s252, %s253
      %p257 = pneg %p251
      %p258 = scmp.eq.s32.totalorder %s32, 1
      %p259 = por %p257, %p258
      %p260 = scmp.ne.s32.totalorder %s252, %s255
      %p261 = scmp.eq.s32.totalorder %s32, 0
      %p262 = por %p260, %p261
      %p263 = scmp.ne.s32.totalorder %s252, %s255
      %p264 = scmp.eq.s32.totalorder %s37, 1
      %p265 = por %p263, %p264
      %p266 = scmp.ne.s32.totalorder %s255, %s256
      %p267 = scmp.eq.s32.totalorder %s37, 0
      %p268 = por %p266, %p267
      %p269 = scmp.ne.s32.totalorder %s255, %s256
      %p270 = scmp.eq.s32.totalorder %s38, 1
      %p271 = por %p269, %p270
      %p273 = scmp.ne.s32.totalorder %s256, %s272
      %p274 = scmp.eq.s32.totalorder %s38, 0
      %p275 = por %p273, %p274
      %s276 = ssub.s32 %s39, %s51
      %s277 = ssub.s32 %s40, %s47
      %s278 = sor.u32 %s276, %s277
      %p279 = scmp.eq.s32.totalorder %s278, 0
      %s281 = sadd.s32 %s280, 1
      %s282 = scalar_select %p279, %s280, %s281
      %p285 = pneg %p279
      %p286 = scmp.eq.s32.totalorder %s32, 1
      %p287 = por %p285, %p286
      %p288 = scmp.ne.s32.totalorder %s280, %s283
      %p289 = scmp.eq.s32.totalorder %s32, 0
      %p290 = por %p288, %p289
      %p291 = scmp.ne.s32.totalorder %s280, %s283
      %p292 = scmp.eq.s32.totalorder %s37, 1
      %p293 = por %p291, %p292
      %p294 = scmp.ne.s32.totalorder %s283, %s284
      %p295 = scmp.eq.s32.totalorder %s37, 0
      %p296 = por %p294, %p295
      %p297 = scmp.ne.s32.totalorder %s283, %s284
      %p298 = scmp.eq.s32.totalorder %s38, 1
      %p299 = por %p297, %p298
      %p301 = scmp.ne.s32.totalorder %s284, %s300
      %p302 = scmp.eq.s32.totalorder %s38, 0
      %p303 = por %p301, %p302
      %s304 = ssub.s32 %s39, %s51
      %p305 = scmp.eq.s32.totalorder %s304, 0
      %s307 = sadd.s32 %s306, 1
      %s308 = scalar_select %p305, %s306, %s307
      %p311 = pneg %p305
      %p312 = scmp.eq.s32.totalorder %s32, 1
      %p313 = por %p311, %p312
      %p314 = scmp.ne.s32.totalorder %s306, %s309
      %p315 = scmp.eq.s32.totalorder %s32, 0
      %p316 = por %p314, %p315
      %p317 = scmp.ne.s32.totalorder %s306, %s309
      %p318 = scmp.eq.s32.totalorder %s37, 1
      %p319 = por %p317, %p318
      %p320 = scmp.ne.s32.totalorder %s309, %s310
      %p321 = scmp.eq.s32.totalorder %s37, 0
      %p322 = por %p320, %p321
      %p323 = scmp.ne.s32.totalorder %s309, %s310
      %p324 = scmp.eq.s32.totalorder %s38, 1
      %p325 = por %p323, %p324
      %p327 = scmp.ne.s32.totalorder %s310, %s326
      %p328 = scmp.eq.s32.totalorder %s38, 0
      %p329 = por %p327, %p328
      %p330 = scmp.le.s32.totalorder 1, %s32
      %p331 = scmp.lt.s32.totalorder %s32, 3
      %p332 = pnand %p330, %p331
      %p333 = pneg %p332
      // Predicated region
      $region9: #{tpu_custom_call.1} parent=5 // pred_check
        _
      $region10: #{tpu_custom_call.1} parent=5 // pred_check_branch
        %335 = sbr.rel (%p332) target = $region12
      $region11: #{tpu_custom_call.1} parent=5 // pred_region
        %s336 = ssub.s32 %s32, 1
      $region12: #{tpu_custom_call.1} parent=5 // pred_fallthru
        _
      %p337 = scmp.lt.s32.totalorder %s32, 2
      // Predicated region
      $region13: #{tpu_custom_call.1} parent=5 // pred_check
        %p338 = pneg %p337
      $region14: #{tpu_custom_call.1} parent=5 // pred_check_branch
        %340 = sbr.rel (%p338) target = $region16
      $region15: #{tpu_custom_call.1} parent=5 // pred_region
        // Predicated region
        $region17: #{tpu_custom_call.1} parent=15 // pred_check
          %p341 = pneg %p66
        $region18: #{tpu_custom_call.1} parent=15 // pred_check_branch
          %343 = sbr.rel (%p341) target = $region20
        $region19: #{tpu_custom_call.1} parent=15 // pred_region
          %s344 = sand.u32 %s56, 1
          %s345 = scalar_lea.sflag [#allocation6], %s344
          %s346 = sand.u32 %s56, 1
          %s347 = smul.addr %s346, 8
          %s348 = scalar_lea.vmem [#allocation5], %s347
          %s350 = ssub.s32 128, 128
          %351 = vsyncadd %s345, %s350
          %s352 = sadd.s32 %s40, %s39
          %s353 = smul.addr %s352, 128
          %s354 = scalar_lea.hbm %s1, %s353
          %s356 = sshll.u32 %s348, 4
          %s357 = int_to_ptr.vmem [resolvable:$true] %s356
          %359 = dma.hbm_to_vmem [thread:$0]  %s354, 128, %s357, %s345
        $region20: #{tpu_custom_call.1} parent=15 // pred_fallthru
          _
        // Predicated region
        $region21: #{tpu_custom_call.1} parent=15 // pred_check
          %p360 = pneg %p94
        $region22: #{tpu_custom_call.1} parent=15 // pred_check_branch
          %362 = sbr.rel (%p360) target = $region24
        $region23: #{tpu_custom_call.1} parent=15 // pred_region
          %s363 = sand.u32 %s32, 1
          %s364 = scalar_lea.sflag [#allocation8], %s363
          %s365 = sand.u32 %s84, 1
          %s366 = smul.addr %s365, 8
          %s367 = scalar_lea.vmem [#allocation7], %s366
          %s369 = ssub.s32 128, 128
          %370 = vsyncadd %s364, %s369
          %s371 = sadd.s32 %s40, %s39
          %s372 = smul.addr %s371, 128
          %s373 = scalar_lea.hbm %s2, %s372
          %s375 = sshll.u32 %s367, 4
          %s376 = int_to_ptr.vmem [resolvable:$true] %s375
          %378 = dma.hbm_to_vmem [thread:$0]  %s373, 128, %s376, %s364
        $region24: #{tpu_custom_call.1} parent=15 // pred_fallthru
          _
        // Predicated region
        $region25: #{tpu_custom_call.1} parent=15 // pred_check
          %p379 = pneg %p122
        $region26: #{tpu_custom_call.1} parent=15 // pred_check_branch
          %381 = sbr.rel (%p379) target = $region28
        $region27: #{tpu_custom_call.1} parent=15 // pred_region
          %s382 = sand.u32 %s32, 1
          %s383 = scalar_lea.sflag [#allocation8], %s382
          %s384 = sand.u32 %s112, 1
          %s385 = smul.addr %s384, 8
          %s386 = scalar_lea.vmem [#allocation9], %s385
          %s388 = ssub.s32 128, 128
          %389 = vsyncadd %s383, %s388
          %s390 = sadd.s32 %s40, %s39
          %s391 = smul.addr %s390, 128
          %s392 = scalar_lea.hbm %s3, %s391
          %s394 = sshll.u32 %s386, 4
          %s395 = int_to_ptr.vmem [resolvable:$true] %s394
          %397 = dma.hbm_to_vmem [thread:$0]  %s392, 128, %s395, %s383
        $region28: #{tpu_custom_call.1} parent=15 // pred_fallthru
          _
        // Predicated region
        $region29: #{tpu_custom_call.1} parent=15 // pred_check
          %p398 = pneg %p150
        $region30: #{tpu_custom_call.1} parent=15 // pred_check_branch
          %400 = sbr.rel (%p398) target = $region32
        $region31: #{tpu_custom_call.1} parent=15 // pred_region
          %s401 = sand.u32 %s32, 1
          %s402 = scalar_lea.sflag [#allocation11], %s401
          %s403 = sand.u32 %s140, 1
          %s404 = smul.addr %s403, 8
          %s405 = scalar_lea.vmem [#allocation10], %s404
          %s407 = ssub.s32 128, 128
          %408 = vsyncadd %s402, %s407
          %s409 = sadd.s32 %s40, %s39
          %s410 = smul.addr %s409, 128
          %s411 = scalar_lea.hbm %s4, %s410
          %s413 = sshll.u32 %s405, 4
          %s414 = int_to_ptr.vmem [resolvable:$true] %s413
          %416 = dma.hbm_to_vmem [thread:$0]  %s411, 128, %s414, %s402
        $region32: #{tpu_custom_call.1} parent=15 // pred_fallthru
          _
        // Predicated region
        $region33: #{tpu_custom_call.1} parent=15 // pred_check
          %p417 = pneg %p178
        $region34: #{tpu_custom_call.1} parent=15 // pred_check_branch
          %419 = sbr.rel (%p417) target = $region36
        $region35: #{tpu_custom_call.1} parent=15 // pred_region
          %p420 = scmp.lt.s32.totalorder %s39, 1
          %s421 = scalar_select %p420, %s39, 1
          %p422 = scmp.lt.s32.totalorder %s40, 0
          %s423 = scalar_select %p422, %s40, 0
          %s424 = sadd.s32 %s423, %s421
          %s425 = smul.addr %s424, 8
          %s426 = scalar_lea.vmem %s5, %s425
        $region36: #{tpu_custom_call.1} parent=15 // pred_fallthru
          _
        // Predicated region
        $region37: #{tpu_custom_call.1} parent=15 // pred_check
          %p427 = pneg %p206
        $region38: #{tpu_custom_call.1} parent=15 // pred_check_branch
          %429 = sbr.rel (%p427) target = $region40
        $region39: #{tpu_custom_call.1} parent=15 // pred_region
          %s430 = sand.u32 %s32, 1
          %s431 = scalar_lea.sflag [#allocation11], %s430
          %s432 = sand.u32 %s196, 1
          %s433 = smul.addr %s432, 8
          %s434 = scalar_lea.vmem [#allocation12], %s433
          %s436 = ssub.s32 128, 128
          %437 = vsyncadd %s431, %s436
          %s438 = sadd.s32 %s40, %s39
          %s439 = smul.addr %s438, 128
          %s440 = scalar_lea.hbm %s6, %s439
          %s442 = sshll.u32 %s434, 4
          %s443 = int_to_ptr.vmem [resolvable:$true] %s442
          %445 = dma.hbm_to_vmem [thread:$0]  %s440, 128, %s443, %s431
        $region40: #{tpu_custom_call.1} parent=15 // pred_fallthru
          _
        // Predicated region
        $region41: #{tpu_custom_call.1} parent=15 // pred_check
          %p446 = pneg %p234
        $region42: #{tpu_custom_call.1} parent=15 // pred_check_branch
          %448 = sbr.rel (%p446) target = $region44
        $region43: #{tpu_custom_call.1} parent=15 // pred_region
          %s449 = sand.u32 %s32, 1
          %s450 = scalar_lea.sflag [#allocation14], %s449
          %s451 = sand.u32 %s224, 1
          %s452 = smul.addr %s451, 8
          %s453 = scalar_lea.vmem [#allocation13], %s452
          %s455 = ssub.s32 128, 128
          %456 = vsyncadd %s450, %s455
          %s457 = sadd.s32 %s40, %s39
          %s458 = smul.addr %s457, 128
          %s459 = scalar_lea.hbm %s7, %s458
          %s461 = sshll.u32 %s453, 4
          %s462 = int_to_ptr.vmem [resolvable:$true] %s461
          %464 = dma.hbm_to_vmem [thread:$0]  %s459, 128, %s462, %s450
        $region44: #{tpu_custom_call.1} parent=15 // pred_fallthru
          _
        // Predicated region
        $region45: #{tpu_custom_call.1} parent=15 // pred_check
          %p465 = pneg %p262
        $region46: #{tpu_custom_call.1} parent=15 // pred_check_branch
          %467 = sbr.rel (%p465) target = $region48
        $region47: #{tpu_custom_call.1} parent=15 // pred_region
          %s468 = sand.u32 %s32, 1
          %s469 = scalar_lea.sflag [#allocation14], %s468
          %s470 = sand.u32 %s252, 1
          %s471 = smul.addr %s470, 8
          %s472 = scalar_lea.vmem [#allocation15], %s471
          %s474 = ssub.s32 128, 128
          %475 = vsyncadd %s469, %s474
          %s476 = sadd.s32 %s40, %s39
          %s477 = smul.addr %s476, 128
          %s478 = scalar_lea.hbm %s8, %s477
          %s480 = sshll.u32 %s472, 4
          %s481 = int_to_ptr.vmem [resolvable:$true] %s480
          %483 = dma.hbm_to_vmem [thread:$0]  %s478, 128, %s481, %s469
        $region48: #{tpu_custom_call.1} parent=15 // pred_fallthru
          _
        // Predicated region
        $region49: #{tpu_custom_call.1} parent=15 // pred_check
          %p484 = pneg %p290
        $region50: #{tpu_custom_call.1} parent=15 // pred_check_branch
          %486 = sbr.rel (%p484) target = $region52
        $region51: #{tpu_custom_call.1} parent=15 // pred_region
          %p487 = scmp.lt.s32.totalorder %s39, 1
          %s488 = scalar_select %p487, %s39, 1
          %p489 = scmp.lt.s32.totalorder %s40, 0
          %s490 = scalar_select %p489, %s40, 0
          %s491 = sadd.s32 %s490, %s488
          %s492 = smul.addr %s491, 8
          %s493 = scalar_lea.vmem %s9, %s492
        $region52: #{tpu_custom_call.1} parent=15 // pred_fallthru
          _
      $region16: #{tpu_custom_call.1} parent=5 // pred_fallthru
        _
      %p494 = scmp.le.s32.totalorder 1, %s32
      %p495 = scmp.lt.s32.totalorder %s32, 3
      %p496 = pnand %p494, %p495
      %p497 = pneg %p496
      // Predicated region
      $region53: #{tpu_custom_call.1} parent=5 // pred_check
        _
      $region54: #{tpu_custom_call.1} parent=5 // pred_check_branch
        %499 = sbr.rel (%p496) target = $region56
      $region55: #{tpu_custom_call.1} parent=5 // pred_region
        %s500 = ssub.s32 %s32, 1
        %s501 = sand.u32 %s59, 1
        %s502 = scalar_lea.sflag [#allocation6], %s501
        %s503 = sand.u32 %s59, 1
        %s504 = smul.addr %s503, 8
        %s505 = scalar_lea.vmem [#allocation5], %s504
        // Predicated region
        $region57: #{tpu_custom_call.1} parent=55 // pred_check
          %p506 = pneg %p72
        $region58: #{tpu_custom_call.1} parent=55 // pred_check_branch
          %508 = sbr.rel (%p506) target = $region60
        $region59: #{tpu_custom_call.1} parent=55 // pred_region
          %509 = dma.done %s502, 128
        $region60: #{tpu_custom_call.1} parent=55 // pred_fallthru
          _
        %s510 = sand.u32 %s37, 1
        %s511 = scalar_lea.sflag [#allocation8], %s510
        %s512 = sand.u32 %s87, 1
        %s513 = smul.addr %s512, 8
        %s514 = scalar_lea.vmem [#allocation7], %s513
        // Predicated region
        $region61: #{tpu_custom_call.1} parent=55 // pred_check
          %p515 = pneg %p100
        $region62: #{tpu_custom_call.1} parent=55 // pred_check_branch
          %517 = sbr.rel (%p515) target = $region64
        $region63: #{tpu_custom_call.1} parent=55 // pred_region
          %518 = dma.done %s511, 128
        $region64: #{tpu_custom_call.1} parent=55 // pred_fallthru
          _
        %s519 = sand.u32 %s37, 1
        %s520 = scalar_lea.sflag [#allocation8], %s519
        %s521 = sand.u32 %s115, 1
        %s522 = smul.addr %s521, 8
        %s523 = scalar_lea.vmem [#allocation9], %s522
        // Predicated region
        $region65: #{tpu_custom_call.1} parent=55 // pred_check
          %p524 = pneg %p128
        $region66: #{tpu_custom_call.1} parent=55 // pred_check_branch
          %526 = sbr.rel (%p524) target = $region68
        $region67: #{tpu_custom_call.1} parent=55 // pred_region
          %527 = dma.done %s520, 128
        $region68: #{tpu_custom_call.1} parent=55 // pred_fallthru
          _
        %s528 = sand.u32 %s37, 1
        %s529 = scalar_lea.sflag [#allocation11], %s528
        %s530 = sand.u32 %s143, 1
        %s531 = smul.addr %s530, 8
        %s532 = scalar_lea.vmem [#allocation10], %s531
        // Predicated region
        $region69: #{tpu_custom_call.1} parent=55 // pred_check
          %p533 = pneg %p156
        $region70: #{tpu_custom_call.1} parent=55 // pred_check_branch
          %535 = sbr.rel (%p533) target = $region72
        $region71: #{tpu_custom_call.1} parent=55 // pred_region
          %536 = dma.done %s529, 128
        $region72: #{tpu_custom_call.1} parent=55 // pred_fallthru
          _
        %s537 = sand.u32 %s37, 1
        %s538 = scalar_lea.sflag [#allocation11], %s537
        %s539 = sand.u32 %s199, 1
        %s540 = smul.addr %s539, 8
        %s541 = scalar_lea.vmem [#allocation12], %s540
        // Predicated region
        $region73: #{tpu_custom_call.1} parent=55 // pred_check
          %p542 = pneg %p212
        $region74: #{tpu_custom_call.1} parent=55 // pred_check_branch
          %544 = sbr.rel (%p542) target = $region76
        $region75: #{tpu_custom_call.1} parent=55 // pred_region
          %545 = dma.done %s538, 128
        $region76: #{tpu_custom_call.1} parent=55 // pred_fallthru
          _
        %s546 = sand.u32 %s37, 1
        %s547 = scalar_lea.sflag [#allocation14], %s546
        %s548 = sand.u32 %s227, 1
        %s549 = smul.addr %s548, 8
        %s550 = scalar_lea.vmem [#allocation13], %s549
        // Predicated region
        $region77: #{tpu_custom_call.1} parent=55 // pred_check
          %p551 = pneg %p240
        $region78: #{tpu_custom_call.1} parent=55 // pred_check_branch
          %553 = sbr.rel (%p551) target = $region80
        $region79: #{tpu_custom_call.1} parent=55 // pred_region
          %554 = dma.done %s547, 128
        $region80: #{tpu_custom_call.1} parent=55 // pred_fallthru
          _
        %s555 = sand.u32 %s37, 1
        %s556 = scalar_lea.sflag [#allocation14], %s555
        %s557 = sand.u32 %s255, 1
        %s558 = smul.addr %s557, 8
        %s559 = scalar_lea.vmem [#allocation15], %s558
        // Predicated region
        $region81: #{tpu_custom_call.1} parent=55 // pred_check
          %p560 = pneg %p268
        $region82: #{tpu_custom_call.1} parent=55 // pred_check_branch
          %562 = sbr.rel (%p560) target = $region84
        $region83: #{tpu_custom_call.1} parent=55 // pred_region
          %563 = dma.done %s556, 128
        $region84: #{tpu_custom_call.1} parent=55 // pred_fallthru
          _
        %s564 = sand.u32 %s59, 1
        %s565 = scalar_lea.sflag [#allocation6], %s564
        %s566 = sand.u32 %s59, 1
        %s567 = smul.addr %s566, 8
        %s568 = scalar_lea.vmem [#allocation5], %s567
        %p569 = pneg %p72
        %p570 = pneg %p69
        %s571 = sand.u32 %s37, 1
        %s572 = scalar_lea.sflag [#allocation8], %s571
        %s573 = sand.u32 %s87, 1
        %s574 = smul.addr %s573, 8
        %s575 = scalar_lea.vmem [#allocation7], %s574
        %p576 = pneg %p100
        %p577 = pneg %p97
        %s578 = sand.u32 %s37, 1
        %s579 = scalar_lea.sflag [#allocation8], %s578
        %s580 = sand.u32 %s115, 1
        %s581 = smul.addr %s580, 8
        %s582 = scalar_lea.vmem [#allocation9], %s581
        %p583 = pneg %p128
        %p584 = pneg %p125
        %s585 = sand.u32 %s37, 1
        %s586 = scalar_lea.sflag [#allocation11], %s585
        %s587 = sand.u32 %s143, 1
        %s588 = smul.addr %s587, 8
        %s589 = scalar_lea.vmem [#allocation10], %s588
        %p590 = pneg %p156
        %p591 = pneg %p153
        %p592 = scmp.lt.s32.totalorder %s41, 1
        %s593 = scalar_select %p592, %s41, 1
        %p594 = scmp.lt.s32.totalorder %s42, 0
        %s595 = scalar_select %p594, %s42, 0
        %s596 = sadd.s32 %s595, %s593
        %s597 = smul.addr %s596, 8
        %s598 = scalar_lea.vmem %s5, %s597
        %p599 = pneg %p184
        %p600 = pneg %p181
        %s601 = sand.u32 %s37, 1
        %s602 = scalar_lea.sflag [#allocation11], %s601
        %s603 = sand.u32 %s199, 1
        %s604 = smul.addr %s603, 8
        %s605 = scalar_lea.vmem [#allocation12], %s604
        %p606 = pneg %p212
        %p607 = pneg %p209
        %s608 = sand.u32 %s37, 1
        %s609 = scalar_lea.sflag [#allocation14], %s608
        %s610 = sand.u32 %s227, 1
        %s611 = smul.addr %s610, 8
        %s612 = scalar_lea.vmem [#allocation13], %s611
        %p613 = pneg %p240
        %p614 = pneg %p237
        %s615 = sand.u32 %s37, 1
        %s616 = scalar_lea.sflag [#allocation14], %s615
        %s617 = sand.u32 %s255, 1
        %s618 = smul.addr %s617, 8
        %s619 = scalar_lea.vmem [#allocation15], %s618
        %p620 = pneg %p268
        %p621 = pneg %p265
        %p622 = scmp.lt.s32.totalorder %s41, 1
        %s623 = scalar_select %p622, %s41, 1
        %p624 = scmp.lt.s32.totalorder %s42, 0
        %s625 = scalar_select %p624, %s42, 0
        %s626 = sadd.s32 %s625, %s623
        %s627 = smul.addr %s626, 8
        %s628 = scalar_lea.vmem %s9, %s627
        %p629 = pneg %p296
        %p630 = pneg %p293
        %p631 = pneg %p322
        %p632 = pneg %p319
        %p633 = scmp.lt.s32.totalorder %s41, 1
        %s634 = scalar_select %p633, %s41, 1
        %s635 = scalar_lea.vmem %s10, %s634
        %p636 = scmp.lt.s32.totalorder %s41, 1
        %s637 = scalar_select %p636, %s41, 1
        %p638 = scmp.lt.s32.totalorder %s42, 0
        %s639 = scalar_select %p638, %s42, 0
        %s640 = sadd.s32 %s639, %s637
        %s641 = smul.addr %s640, 8
        %s642 = scalar_lea.vmem %s5, %s641
        %p643 = scmp.lt.s32.totalorder %s41, 1
        %s644 = scalar_select %p643, %s41, 1
        %p645 = scmp.lt.s32.totalorder %s42, 0
        %s646 = scalar_select %p645, %s42, 0
        %s647 = sadd.s32 %s646, %s644
        %s648 = smul.addr %s647, 8
        %s649 = scalar_lea.vmem %s9, %s648
        %p650 = scmp.lt.s32.totalorder %s41, 1
        %s651 = scalar_select %p650, %s41, 1
        %s652 = scalar_lea.vmem %s10, %s651
        %p653 = scmp.eq.s32.totalorder %s42, 0
        // Predicated region
        $region85: #{tpu_custom_call.1} parent=55 // pred_check
          %p654 = pneg %p653
        $region86: #{tpu_custom_call.1} parent=55 // pred_check_branch
          %656 = sbr.rel (%p654) target = $region88
        $region87: #{tpu_custom_call.1} parent=55 // pred_region
          %657 = vst [vmem:[#allocation2] sm:$0x1] 0.0
        $region88: #{tpu_custom_call.1} parent=55 // pred_fallthru
          _
        %s658 = smul.u32 %s41, 7
        %v659 = vld [vmem:[%s505] sm:$0xff]
        %v660 = vld [vmem:[%s514] sm:$0xff]
        %s661 = sld [smem:[#allocation4 + %s658]]
        %v662 = vstv %s661
        %v663 = vmul.f32 %v660, %v662
        %v664 = vsub.f32 %v659, %v663
        %v665 = vld [vmem:[%s523] sm:$0xff]
        %s666 = sadd.s32 %s658, 1
        %s667 = sld [smem:[#allocation4 + %s666]]
        %v668 = vstv %s667
        %v669 = vmul.f32 %v665, %v668
        %v670 = vsub.f32 %v664, %v669
        %v671 = vld [vmem:[%s532] sm:$0xff]
        %s672 = sadd.s32 %s658, 2
        %s673 = sld [smem:[#allocation4 + %s672]]
        %v674 = vstv %s673
        %v675 = vmul.f32 %v671, %v674
        %v676 = vsub.f32 %v670, %v675
        %v677 = vld [vmem:[%s642] sm:$0xff]
        %s678 = sadd.s32 %s658, 3
        %s679 = sld [smem:[#allocation4 + %s678]]
        %v680 = vstv %s679
        %v681 = vmul.f32 %v677, %v680
        %v682 = vsub.f32 %v676, %v681
        %v683 = vld [vmem:[%s541] sm:$0xff]
        %s684 = sadd.s32 %s658, 4
        %s685 = sld [smem:[#allocation4 + %s684]]
        %v686 = vstv %s685
        %v687 = vmul.f32 %v683, %v686
        %v688 = vsub.f32 %v682, %v687
        %v689 = vld [vmem:[%s550] sm:$0xff]
        %s690 = sadd.s32 %s658, 5
        %s691 = sld [smem:[#allocation4 + %s690]]
        %v692 = vstv %s691
        %v693 = vmul.f32 %v689, %v692
        %v694 = vsub.f32 %v688, %v693
        %v695 = vld [vmem:[%s559] sm:$0xff]
        %s696 = sadd.s32 %s658, 6
        %s697 = sld [smem:[#allocation4 + %s696]]
        %v698 = vstv %s697
        %v699 = vmul.f32 %v695, %v698
        %v700 = vsub.f32 %v694, %v699
        %v701 = vld [vmem:[%s649] sm:$0xff]
        %v702 = vsub.f32 %v700, %v701
        %v703 = vmul.f32 %v702, %v702
        %v704 = vrot.slane %v703, 4
        %v705 = vadd.f32 %v703, %v704
        %v706 = vrot.slane %v705, 2
        %v707 = vadd.f32 %v705, %v706
        %v708 = vrot.slane %v707, 1
        %v709 = vadd.f32 %v707, %v708
        %v710 = vld [vmem:[#allocation2] sm:$0x1]
        %v711 = vadd.f32 %v710, %v709
        %712 = vst [vmem:[#allocation2] sm:$0x1] %v711
        // Predicated region
        $region89: #{tpu_custom_call.1} parent=55 // pred_check
          %p713 = pneg %p653
        $region90: #{tpu_custom_call.1} parent=55 // pred_check_branch
          %715 = sbr.rel (%p713) target = $region92
        $region91: #{tpu_custom_call.1} parent=55 // pred_region
          %v716 = vld [vmem:[#allocation2] sm:$0x1]
          %vm717 = vcmask 1040384
          %v718 = vsel %vm717, %v716, 0.0
          %719 = vadd.xlane.f32.xlu0 %v718
          %v720 = vpop.xlane.xlu0 %719
          %vm721 = vcmask 0
          %722 = vst.msk [vmem:[%s652] sm:$0x1] %vm721, %v720
        $region92: #{tpu_custom_call.1} parent=55 // pred_fallthru
          _
        %p723 = scmp.lt.s32.totalorder %s41, 1
        %s724 = scalar_select %p723, %s41, 1
        %s725 = scalar_lea.vmem %s10, %s724
        // Predicated region
        $region93: #{tpu_custom_call.1} parent=55 // pred_check
          %p726 = pneg %p319
        $region94: #{tpu_custom_call.1} parent=55 // pred_check_branch
          %728 = sbr.rel (%p726) target = $region96
        $region95: #{tpu_custom_call.1} parent=55 // pred_region
          _
        $region96: #{tpu_custom_call.1} parent=55 // pred_fallthru
          _
      $region56: #{tpu_custom_call.1} parent=5 // pred_fallthru
        _
      %p729 = scmp.le.s32.totalorder 2, %s32
      // Predicated region
      $region97: #{tpu_custom_call.1} parent=5 // pred_check
        %p730 = pneg %p729
      $region98: #{tpu_custom_call.1} parent=5 // pred_check_branch
        %732 = sbr.rel (%p730) target = $region100
      $region99: #{tpu_custom_call.1} parent=5 // pred_region
        %s733 = ssub.s32 %s32, 2
        // Predicated region
        $region101: #{tpu_custom_call.1} parent=99 // pred_check
          %p734 = pneg %p325
        $region102: #{tpu_custom_call.1} parent=99 // pred_check_branch
          %736 = sbr.rel (%p734) target = $region104
        $region103: #{tpu_custom_call.1} parent=99 // pred_region
          %p737 = scmp.lt.s32.totalorder %s43, 1
          %s738 = scalar_select %p737, %s43, 1
          %s739 = scalar_lea.vmem %s10, %s738
        $region104: #{tpu_custom_call.1} parent=99 // pred_fallthru
          _
      $region100: #{tpu_custom_call.1} parent=5 // pred_fallthru
        _
    $region6: #{tpu_custom_call.1} parent=1 // loop_footer
      %s36 = sadd.s32 1, %s32
    $region7: #{tpu_custom_call.1} parent=1 // loop_footer_branch
      %31 = sbr.rel target = $region3
    $region8: #{tpu_custom_call.1} parent=1 // loop_exit
      _
    %740 = vsyncpa [#allocation6], 1
    %s741 = scalar_lea.sflag [#allocation6], 1
    %742 = vsyncpa %s741, 1
    %743 = vsyncpa [#allocation8], 1
    %s744 = scalar_lea.sflag [#allocation8], 1
    %745 = vsyncpa %s744, 1
    %746 = vsyncpa [#allocation11], 1
    %s747 = scalar_lea.sflag [#allocation11], 1
    %748 = vsyncpa %s747, 1
    %749 = vsyncpa [#allocation14], 1
    %s750 = scalar_lea.sflag [#allocation14], 1
    %751 = vsyncpa %s750, 1

</llo_original>
